<compile_context>
chip_gen: v5e
topology: v5e:2x2
jax: 0.10.0
libtpu: 0.0.40
codegen_flags: <defaults>
</compile_context>

<pallas_src>
import functools

import jax
import jax.numpy as jnp
from jax.experimental import pallas as pl
from jax.experimental.pallas import tpu as pltpu


def _bn_stats_kernel(x_ref, mean_ref, var_ref, sum_ref, sq_ref,
                     *, total_count, lanes, n_chunks):
    # Grid: (ci, n, hw).  x_ref tile: (1, C_TILE, HW_TILE).
    n = pl.program_id(1)
    hw = pl.program_id(2)

    @pl.when(jnp.logical_and(n == 0, hw == 0))
    def _init():
        sum_ref[...] = jnp.zeros_like(sum_ref)
        sq_ref[...] = jnp.zeros_like(sq_ref)

    x = x_ref[0].astype(jnp.float32)            # (C_TILE, HW_TILE) in VMEM

    # Elementwise (VALU-only) accumulation into (C_TILE, lanes) partials;
    # static unroll over lane chunks keeps XLU out of the hot loop.
    s = sum_ref[...]
    q = sq_ref[...]
    for c in range(n_chunks):
        chunk = x[:, c * lanes:(c + 1) * lanes]
        s = s + chunk
        q = q + chunk * chunk
    sum_ref[...] = s
    sq_ref[...] = q

    is_last = jnp.logical_and(n == pl.num_programs(1) - 1,
                              hw == pl.num_programs(2) - 1)

    @pl.when(is_last)
    def _finalize():
        cnt = jnp.float32(total_count)
        ssum = jnp.sum(sum_ref[...], axis=1, keepdims=True)   # (C_TILE, 1)
        ssq = jnp.sum(sq_ref[...], axis=1, keepdims=True)     # (C_TILE, 1)
        mean = ssum / cnt
        # Unbiased variance (ddof=1), single-pass form, f32 accumulation.
        # NOTE: breaks (inf/nan) when total_count == 1, same as torch.var.
        var = (ssq - ssum * mean) / (cnt - 1.0)
        var = jnp.maximum(var, 0.0)   # guard tiny negatives from cancellation
        mean_ref[...] = mean
        var_ref[...] = var


def _pick_tile(dim, unit, cap):
    """Largest divisor of `dim` that is a multiple of `unit` and <= cap.

    Falls back to the full extent (always a legal block dim) when no such
    divisor exists (e.g. C=4 < 8, or an odd HW).
    """
    best = None
    limit = min(dim, cap)
    for d in range(unit, limit + 1, unit):
        if dim % d == 0:
            best = d
    return best if best is not None else dim


def _bn_stats_pallas(x_nchw):
    """x: (N, C, H, W), any float dtype -> per-channel f32 (mean, var), each (C,)."""
    N, C, H, W = x_nchw.shape
    HW = H * W
    x3 = x_nchw.reshape(N, C, HW)          # free reshape of contiguous NCHW

    c_tile = _pick_tile(C, 8, 256)
    hw_tile = _pick_tile(HW, 128, 2048)
    lanes = 128 if hw_tile % 128 == 0 else hw_tile
    n_chunks = hw_tile // lanes
    total = N * HW

    grid = (C // c_tile, N, HW // hw_tile)

    kernel = functools.partial(_bn_stats_kernel,
                               total_count=total, lanes=lanes, n_chunks=n_chunks)

    itemsize = jnp.dtype(x_nchw.dtype).itemsize
    cost = pl.CostEstimate(
        flops=3 * N * C * HW,              # add + mul + add per element (approx)
        transcendentals=0,
        bytes_accessed=N * C * HW * itemsize + 2 * C * 4,
    )

    mean_c1, var_c1 = pl.pallas_call(
        kernel,
        out_shape=(jax.ShapeDtypeStruct((C, 1), jnp.float32),
                   jax.ShapeDtypeStruct((C, 1), jnp.float32)),
        grid_spec=pltpu.PrefetchScalarGridSpec(
            num_scalar_prefetch=0,
            grid=grid,
            in_specs=[pl.BlockSpec((1, c_tile, hw_tile),
                                   lambda ci, n, hw: (n, ci, hw))],
            out_specs=(pl.BlockSpec((c_tile, 1), lambda ci, n, hw: (ci, 0)),
                       pl.BlockSpec((c_tile, 1), lambda ci, n, hw: (ci, 0))),
            scratch_shapes=[pltpu.VMEM((c_tile, lanes), jnp.float32),
                            pltpu.VMEM((c_tile, lanes), jnp.float32)]),
        compiler_params=pltpu.CompilerParams(
            dimension_semantics=("parallel", "arbitrary", "arbitrary"),
            vmem_limit_bytes=32 * 1024 * 1024),
        cost_estimate=cost,
    )(x3)
    return mean_c1[:, 0], var_c1[:, 0]


class BatchNorm2dStats:
    """JAX/Pallas port of the PyTorch BatchNorm2dStats module."""

    def __init__(self, num_features, track_running_stats=True, eps=1e-05,
                 momentum=0.1):
        self.num_features = num_features
        self.keep_running_stats = track_running_stats
        self.eps = eps
        if self.keep_running_stats:
            self.running_mean = jnp.zeros((num_features,), jnp.float32)
            self.running_var = jnp.ones((num_features,), jnp.float32)
            self.momentum = momentum
        self.training = True

    def __call__(self, x):
        N, C, H, W = x.shape
        assert C == self.num_features

        if self.training or not self.keep_running_stats:
            mean, var = _bn_stats_pallas(x)    # native-dtype input, f32 stats
            if self.keep_running_stats:
                # TODO(synk): Python-attribute EMA update; under jax.jit this
                # side effect does not behave like torch's in-place buffers.
                self.running_mean = ((1 - self.momentum) * self.running_mean
                                     + self.momentum * mean)
                self.running_var = ((1 - self.momentum) * self.running_var
                                    + self.momentum * var)
        else:
            mean = self.running_mean
            var = self.running_var

        var = var + self.eps
        # Kept to match PyTorch's expand_as return contract; fusing this
        # broadcast into the consumer would save ~2x-input HBM writes.
        mean_full = jnp.broadcast_to(mean.reshape(1, C, 1, 1), x.shape).astype(x.dtype)
        var_full = jnp.broadcast_to(var.reshape(1, C, 1, 1), x.shape).astype(x.dtype)
        return mean_full, var_full


if __name__ == "__main__":
    key = jax.random.PRNGKey(0)
    N, C, H, W = 2, 4, 16, 16
    x = jax.random.normal(key, (N, C, H, W), dtype=jnp.float32) * 2.0 + 0.5

    mod = BatchNorm2dStats(num_features=C)
    mean_out, var_out = mod(x)
    jax.block_until_ready((mean_out, var_out))

    # Reference check in plain JAX (unbiased variance, two-pass).
    x_cm = jnp.transpose(x, (1, 0, 2, 3)).reshape(C, -1)
    ref_mean = jnp.mean(x_cm, axis=1)
    ref_var = jnp.var(x_cm, axis=1, ddof=1) + mod.eps
    assert mean_out.shape == x.shape and var_out.shape == x.shape
    assert jnp.allclose(mean_out[0, :, 0, 0], ref_mean, atol=1e-5, rtol=1e-5)
    assert jnp.allclose(var_out[0, :, 0, 0], ref_var, atol=1e-5, rtol=1e-5)

    print("KERNEL_OK")
</pallas_src>

<mosaic_0001>
module attributes {stable_mosaic.version = 11 : i64} {
  func.func @_bn_stats_kernel(%arg0: i32, %arg1: i32, %arg2: i32, %arg3: memref<1x4x256xf32, #tpu.memory_space<vmem>>, %arg4: memref<4x1xf32, #tpu.memory_space<vmem>>, %arg5: memref<4x1xf32, #tpu.memory_space<vmem>>, %arg6: memref<4x128xf32, #tpu.memory_space<vmem>>, %arg7: memref<4x128xf32, #tpu.memory_space<vmem>>) attributes {dimension_semantics = [#tpu.dimension_semantics<parallel>, #tpu.dimension_semantics<arbitrary>, #tpu.dimension_semantics<arbitrary>], iteration_bounds = array<i64: 1, 2, 1>, scalar_prefetch = 0 : i64, scratch_operands = 2 : i64, tpu.core_type = #tpu.core_type<tc>, window_params = [{transform_indices = @transform_0, window_bounds = array<i64: 1, 4, 256>}, {transform_indices = @transform_1, window_bounds = array<i64: 4, 1>}, {transform_indices = @transform_2, window_bounds = array<i64: 4, 1>}]} {
    %c0_i32 = arith.constant 0 : i32
    %0 = arith.cmpi eq, %arg1, %c0_i32 : i32
    %c0_i32_0 = arith.constant 0 : i32
    %1 = arith.cmpi eq, %arg2, %c0_i32_0 : i32
    %2 = arith.andi %0, %1 : i1
    %3 = arith.extui %2 : i1 to i32
    %c0_i32_1 = arith.constant 0 : i32
    %4 = arith.cmpi ne, %3, %c0_i32_1 : i32
    scf.if %4 {
      %cst = arith.constant 0.000000e+00 : f32
      %24 = vector.broadcast %cst : f32 to vector<4x128xf32>
      %c0_14 = arith.constant 0 : index
      %c0_15 = arith.constant 0 : index
      %25 = vector.load %arg6[%c0_14, %c0_15] : memref<4x128xf32, #tpu.memory_space<vmem>>, vector<4x128xf32>
      tpu.vector_store %arg6[%c0_14, %c0_15], %24 {strides = array<i32>} : memref<4x128xf32, #tpu.memory_space<vmem>>, vector<4x128xf32>,
      %cst_16 = arith.constant 0.000000e+00 : f32
      %26 = vector.broadcast %cst_16 : f32 to vector<4x128xf32>
      %c0_17 = arith.constant 0 : index
      %c0_18 = arith.constant 0 : index
      %27 = vector.load %arg7[%c0_17, %c0_18] : memref<4x128xf32, #tpu.memory_space<vmem>>, vector<4x128xf32>
      tpu.vector_store %arg7[%c0_17, %c0_18], %26 {strides = array<i32>} : memref<4x128xf32, #tpu.memory_space<vmem>>, vector<4x128xf32>,
    } else {
    }
    %c0 = arith.constant 0 : index
    %c0_2 = arith.constant 0 : index
    %c0_3 = arith.constant 0 : index
    %5 = vector.load %arg3[%c0, %c0_2, %c0_3] : memref<1x4x256xf32, #tpu.memory_space<vmem>>, vector<1x4x256xf32>
    %6 = vector.shape_cast %5 : vector<1x4x256xf32> to vector<4x256xf32>
    %c0_4 = arith.constant 0 : index
    %c0_5 = arith.constant 0 : index
    %7 = vector.load %arg6[%c0_4, %c0_5] : memref<4x128xf32, #tpu.memory_space<vmem>>, vector<4x128xf32>
    %c0_6 = arith.constant 0 : index
    %c0_7 = arith.constant 0 : index
    %8 = vector.load %arg7[%c0_6, %c0_7] : memref<4x128xf32, #tpu.memory_space<vmem>>, vector<4x128xf32>
    %9 = vector.extract_strided_slice %6 {offsets = [0, 0], sizes = [4, 128], strides = [1, 1]} : vector<4x256xf32> to vector<4x128xf32>
    %10 = arith.addf %7, %9 : vector<4x128xf32>
    %11 = arith.mulf %9, %9 : vector<4x128xf32>
    %12 = arith.addf %8, %11 : vector<4x128xf32>
    %13 = vector.extract_strided_slice %6 {offsets = [0, 128], sizes = [4, 128], strides = [1, 1]} : vector<4x256xf32> to vector<4x128xf32>
    %14 = arith.addf %10, %13 : vector<4x128xf32>
    %15 = arith.mulf %13, %13 : vector<4x128xf32>
    %16 = arith.addf %12, %15 : vector<4x128xf32>
    %c0_8 = arith.constant 0 : index
    %c0_9 = arith.constant 0 : index
    %17 = vector.load %arg6[%c0_8, %c0_9] : memref<4x128xf32, #tpu.memory_space<vmem>>, vector<4x128xf32>
    tpu.vector_store %arg6[%c0_8, %c0_9], %14 {strides = array<i32>} : memref<4x128xf32, #tpu.memory_space<vmem>>, vector<4x128xf32>,
    %c0_10 = arith.constant 0 : index
    %c0_11 = arith.constant 0 : index
    %18 = vector.load %arg7[%c0_10, %c0_11] : memref<4x128xf32, #tpu.memory_space<vmem>>, vector<4x128xf32>
    tpu.vector_store %arg7[%c0_10, %c0_11], %16 {strides = array<i32>} : memref<4x128xf32, #tpu.memory_space<vmem>>, vector<4x128xf32>,
    %c1_i32 = arith.constant 1 : i32
    %19 = arith.cmpi eq, %arg1, %c1_i32 : i32
    %c0_i32_12 = arith.constant 0 : i32
    %20 = arith.cmpi eq, %arg2, %c0_i32_12 : i32
    %21 = arith.andi %19, %20 : i1
    %22 = arith.extui %21 : i1 to i32
    %c0_i32_13 = arith.constant 0 : i32
    %23 = arith.cmpi ne, %22, %c0_i32_13 : i32
    scf.if %23 {
      %c0_14 = arith.constant 0 : index
      %c0_15 = arith.constant 0 : index
      %24 = vector.load %arg6[%c0_14, %c0_15] : memref<4x128xf32, #tpu.memory_space<vmem>>, vector<4x128xf32>
      %cst = arith.constant dense<0.000000e+00> : vector<4xf32>
      %25 = vector.multi_reduction <add>, %24, %cst [1] : vector<4x128xf32> to vector<4xf32>
      %26 = vector.shape_cast %25 : vector<4xf32> to vector<4x1xf32>
      %c0_16 = arith.constant 0 : index
      %c0_17 = arith.constant 0 : index
      %27 = vector.load %arg7[%c0_16, %c0_17] : memref<4x128xf32, #tpu.memory_space<vmem>>, vector<4x128xf32>
      %cst_18 = arith.constant dense<0.000000e+00> : vector<4xf32>
      %28 = vector.multi_reduction <add>, %27, %cst_18 [1] : vector<4x128xf32> to vector<4xf32>
      %29 = vector.shape_cast %28 : vector<4xf32> to vector<4x1xf32>
      %cst_19 = arith.constant 5.120000e+02 : f32
      %30 = vector.broadcast %cst_19 : f32 to vector<4x1xf32>
      %31 = arith.divf %26, %30 : vector<4x1xf32>
      %32 = arith.mulf %26, %31 : vector<4x1xf32>
      %33 = arith.subf %29, %32 : vector<4x1xf32>
      %cst_20 = arith.constant 5.120000e+02 : f32
      %cst_21 = arith.constant 1.000000e+00 : f32
      %34 = arith.subf %cst_20, %cst_21 : f32
      %35 = vector.broadcast %34 : f32 to vector<4x1xf32>
      %36 = arith.divf %33, %35 : vector<4x1xf32>
      %cst_22 = arith.constant 0.000000e+00 : f32
      %37 = vector.broadcast %cst_22 : f32 to vector<4x1xf32>
      %38 = arith.maximumf %36, %37 : vector<4x1xf32>
      %c0_23 = arith.constant 0 : index
      %c0_24 = arith.constant 0 : index
      %39 = vector.load %arg4[%c0_23, %c0_24] : memref<4x1xf32, #tpu.memory_space<vmem>>, vector<4x1xf32>
      tpu.vector_store %arg4[%c0_23, %c0_24], %31 {strides = array<i32>} : memref<4x1xf32, #tpu.memory_space<vmem>>, vector<4x1xf32>,
      %c0_25 = arith.constant 0 : index
      %c0_26 = arith.constant 0 : index
      %40 = vector.load %arg5[%c0_25, %c0_26] : memref<4x1xf32, #tpu.memory_space<vmem>>, vector<4x1xf32>
      tpu.vector_store %arg5[%c0_25, %c0_26], %38 {strides = array<i32>} : memref<4x1xf32, #tpu.memory_space<vmem>>, vector<4x1xf32>,
    } else {
    }
    return
  }
  func.func @transform_0(%arg0: i32, %arg1: i32, %arg2: i32) -> (i32, i32, i32) {
    %c0_i32 = arith.constant 0 : i32
    return %arg1, %arg0, %arg2 : i32, i32, i32
  }
  func.func @transform_1(%arg0: i32, %arg1: i32, %arg2: i32) -> (i32, i32) {
    %c0_i32 = arith.constant 0 : i32
    %c0_i32_0 = arith.constant 0 : i32
    return %arg0, %c0_i32 : i32, i32
  }
  func.func @transform_2(%arg0: i32, %arg1: i32, %arg2: i32) -> (i32, i32) {
    %c0_i32 = arith.constant 0 : i32
    %c0_i32_0 = arith.constant 0 : i32
    return %arg0, %c0_i32 : i32, i32
  }
}

</mosaic_0001>

<llo_original>
// kernel: tpu_custom_call.1
$region0: #{tpu_custom_call.1}
  #allocation0 [shape = 'u32[]', space=smem, size = 0x4, offset = 0x4, fixed_abs, tag = 'smem constant byte address 0x4 - core index']
  #allocation1 [shape = 'u32[72,128]{1,0:T(1,128)}', space=vmem, size = 0x9000, scoped, tag = 'internal scratch']
  #allocation2 [shape = 'f32[4,128]{1,0:T(4,128)}', space=vmem, size = 0x800, scoped, tag = 'scratch operand']
  #allocation3 [shape = 'f32[4,128]{1,0:T(4,128)}', space=vmem, size = 0x800, scoped, tag = 'scratch operand']
  %s0 = inlined_call_operand.hbm [shape: f32[2,4,256], index: 0, kind: input, shape index: {}]
  %s1 = inlined_call_operand.vmem [shape: f32[4,1], index: 1, kind: output, shape index: {0}]
  %s2 = inlined_call_operand.vmem [shape: f32[4,1], index: 2, kind: output, shape index: {1}]
  %3 = xla_tuple %s1, %s2
  %s4 = sld [smem:[#allocation0]]
  $region57: #{tpu_custom_call.1} parent=0
    _
  %s6 = ssub.s32 1, %s4
  %s7 = scalar_select 0, %s6, %s4
  $region1: #{tpu_custom_call.1} parent=0
    #allocation4 [shape = 'u8[8192]{0}', space=vmem, size = 0x2000, scoped, tag = 'input window, operand 0']
    #allocation5 [shape = 's32[2]{0}', space=sflag, size = 0x8, scoped, tag = 'scoped memory for tpu_custom_call.1']
    %8 = vsyncpa [#allocation5], 0
    %s9 = scalar_lea.sflag [#allocation5], 1
    %10 = vsyncpa %s9, 0
    loop: start=0, step=1, limit=4
    $region2: #{tpu_custom_call.1} parent=1 // loop_pre_header
      _
    $region3: #{tpu_custom_call.1} parent=1 // loop_header
      %s12 = sphi 0, %s16
      %p13 = scmp.ge.s32.totalorder %s12, 4
      %s19 = sphi 0, %s38
      %s20 = sphi 0, %s34
      %s21 = sphi 0, %s30
      %s22 = sphi 0, %s19
      %s23 = sphi 0, %s20
      %s24 = sphi 0, %s21
      %s25 = sphi 0, %s22
      %s26 = sphi 0, %s23
      %s27 = sphi 0, %s24
      %s45 = sphi 0, %s47
      %s48 = sphi 0, %s45
      %s49 = sphi 0, %s48
      %s65 = sphi 0, %s49
      %s71 = sphi 0, %s73
      %s74 = sphi 0, %s71
      %s75 = sphi 0, %s74
      %s91 = sphi 0, %s75
      %s97 = sphi 0, %s99
      %s100 = sphi 0, %s97
      %s101 = sphi 0, %s100
      %s117 = sphi 0, %s101
    $region4: #{tpu_custom_call.1} parent=1 // loop_header_branch
      %15 = sbr.rel (%p13) target = $region8
    $region5: #{tpu_custom_call.1} parent=1 // loop_body
      %s17 = ssub.s32 %s12, 1
      %s18 = ssub.s32 %s12, 2
      %s28 = sadd.s32 1, %s21
      %p29 = scmp.ge.s32.totalorder %s28, 1
      %s30 = scalar_select %p29, 0, %s28
      %s31 = sadd.s32 1, %s20
      %s32 = scalar_select %p29, %s31, %s20
      %p33 = scmp.ge.s32.totalorder %s32, 2
      %s34 = scalar_select %p33, 0, %s32
      %s35 = sadd.s32 1, %s19
      %s36 = scalar_select %p33, %s35, %s19
      %p37 = scmp.ge.s32.totalorder %s36, 1
      %s38 = scalar_select %p37, 0, %s36
      %s39 = ssub.s32 %s20, %s34
      %s40 = ssub.s32 %s19, %s38
      %s41 = sor.u32 %s39, %s40
      %s42 = ssub.s32 %s21, %s30
      %s43 = sor.u32 %s41, %s42
      %p44 = scmp.eq.s32.totalorder %s43, 0
      %s46 = sadd.s32 %s45, 1
      %s47 = scalar_select %p44, %s45, %s46
      %p50 = pneg %p44
      %p51 = scmp.eq.s32.totalorder %s12, 1
      %p52 = por %p50, %p51
      %p53 = scmp.ne.s32.totalorder %s45, %s48
      %p54 = scmp.eq.s32.totalorder %s12, 0
      %p55 = por %p53, %p54
      %p56 = scmp.ne.s32.totalorder %s45, %s48
      %p57 = scmp.eq.s32.totalorder %s17, 1
      %p58 = por %p56, %p57
      %p59 = scmp.ne.s32.totalorder %s48, %s49
      %p60 = scmp.eq.s32.totalorder %s17, 0
      %p61 = por %p59, %p60
      %p62 = scmp.ne.s32.totalorder %s48, %s49
      %p63 = scmp.eq.s32.totalorder %s18, 1
      %p64 = por %p62, %p63
      %p66 = scmp.ne.s32.totalorder %s49, %s65
      %p67 = scmp.eq.s32.totalorder %s18, 0
      %p68 = por %p66, %p67
      %s69 = ssub.s32 %s19, %s38
      %p70 = scmp.eq.s32.totalorder %s69, 0
      %s72 = sadd.s32 %s71, 1
      %s73 = scalar_select %p70, %s71, %s72
      %p76 = pneg %p70
      %p77 = scmp.eq.s32.totalorder %s12, 1
      %p78 = por %p76, %p77
      %p79 = scmp.ne.s32.totalorder %s71, %s74
      %p80 = scmp.eq.s32.totalorder %s12, 0
      %p81 = por %p79, %p80
      %p82 = scmp.ne.s32.totalorder %s71, %s74
      %p83 = scmp.eq.s32.totalorder %s17, 1
      %p84 = por %p82, %p83
      %p85 = scmp.ne.s32.totalorder %s74, %s75
      %p86 = scmp.eq.s32.totalorder %s17, 0
      %p87 = por %p85, %p86
      %p88 = scmp.ne.s32.totalorder %s74, %s75
      %p89 = scmp.eq.s32.totalorder %s18, 1
      %p90 = por %p88, %p89
      %p92 = scmp.ne.s32.totalorder %s75, %s91
      %p93 = scmp.eq.s32.totalorder %s18, 0
      %p94 = por %p92, %p93
      %s95 = ssub.s32 %s19, %s38
      %p96 = scmp.eq.s32.totalorder %s95, 0
      %s98 = sadd.s32 %s97, 1
      %s99 = scalar_select %p96, %s97, %s98
      %p102 = pneg %p96
      %p103 = scmp.eq.s32.totalorder %s12, 1
      %p104 = por %p102, %p103
      %p105 = scmp.ne.s32.totalorder %s97, %s100
      %p106 = scmp.eq.s32.totalorder %s12, 0
      %p107 = por %p105, %p106
      %p108 = scmp.ne.s32.totalorder %s97, %s100
      %p109 = scmp.eq.s32.totalorder %s17, 1
      %p110 = por %p108, %p109
      %p111 = scmp.ne.s32.totalorder %s100, %s101
      %p112 = scmp.eq.s32.totalorder %s17, 0
      %p113 = por %p111, %p112
      %p114 = scmp.ne.s32.totalorder %s100, %s101
      %p115 = scmp.eq.s32.totalorder %s18, 1
      %p116 = por %p114, %p115
      %p118 = scmp.ne.s32.totalorder %s101, %s117
      %p119 = scmp.eq.s32.totalorder %s18, 0
      %p120 = por %p118, %p119
      %p121 = scmp.le.s32.totalorder 1, %s12
      %p122 = scmp.lt.s32.totalorder %s12, 3
      %p123 = pnand %p121, %p122
      %p124 = pneg %p123
      // Predicated region
      $region9: #{tpu_custom_call.1} parent=5 // pred_check
        _
      $region10: #{tpu_custom_call.1} parent=5 // pred_check_branch
        %126 = sbr.rel (%p123) target = $region12
      $region11: #{tpu_custom_call.1} parent=5 // pred_region
        %s127 = ssub.s32 %s12, 1
      $region12: #{tpu_custom_call.1} parent=5 // pred_fallthru
        _
      %p128 = scmp.lt.s32.totalorder %s12, 2
      // Predicated region
      $region13: #{tpu_custom_call.1} parent=5 // pred_check
        %p129 = pneg %p128
      $region14: #{tpu_custom_call.1} parent=5 // pred_check_branch
        %131 = sbr.rel (%p129) target = $region16
      $region15: #{tpu_custom_call.1} parent=5 // pred_region
        // Predicated region
        $region17: #{tpu_custom_call.1} parent=15 // pred_check
          %p132 = pneg %p55
        $region18: #{tpu_custom_call.1} parent=15 // pred_check_branch
          %134 = sbr.rel (%p132) target = $region20
        $region19: #{tpu_custom_call.1} parent=15 // pred_region
          %s135 = sand.u32 %s45, 1
          %s136 = scalar_lea.sflag [#allocation5], %s135
          %s137 = sand.u32 %s45, 1
          %s138 = smul.addr %s137, 8
          %s139 = scalar_lea.vmem [#allocation4], %s138
          %s140 = smul.u32 2, %s21
          %142 = vsyncadd %s136, 0
          %s143 = smul.addr %s19, 2
          %s144 = sadd.s32 %s140, %s143
          %s145 = smul.addr %s20, 2
          %s146 = sadd.s32 %s144, %s145
          %s147 = smul.addr %s146, 4
          %s148 = scalar_lea.hbm %s0, %s147
          %s150 = sshll.u32 %s148, 4
          %s151 = int_to_ptr.hbm [resolvable:$true] %s150
          %s152 = sshll.u32 %s139, 4
          %s153 = int_to_ptr.vmem [resolvable:$true] %s152
          %155 = dma.hbm_to_vmem [thread:$0]  %s151, 128, %s153, %s136
        $region20: #{tpu_custom_call.1} parent=15 // pred_fallthru
          _
      $region16: #{tpu_custom_call.1} parent=5 // pred_fallthru
        _
      %p156 = scmp.le.s32.totalorder 1, %s12
      %p157 = scmp.lt.s32.totalorder %s12, 3
      %p158 = pnand %p156, %p157
      %p159 = pneg %p158
      // Predicated region
      $region21: #{tpu_custom_call.1} parent=5 // pred_check
        _
      $region22: #{tpu_custom_call.1} parent=5 // pred_check_branch
        %161 = sbr.rel (%p158) target = $region24
      $region23: #{tpu_custom_call.1} parent=5 // pred_region
        %s162 = ssub.s32 %s12, 1
        %s163 = sand.u32 %s48, 1
        %s164 = scalar_lea.sflag [#allocation5], %s163
        %s165 = sand.u32 %s48, 1
        %s166 = smul.addr %s165, 8
        %s167 = scalar_lea.vmem [#allocation4], %s166
        // Predicated region
        $region25: #{tpu_custom_call.1} parent=23 // pred_check
          %p168 = pneg %p61
        $region26: #{tpu_custom_call.1} parent=23 // pred_check_branch
          %170 = sbr.rel (%p168) target = $region28
        $region27: #{tpu_custom_call.1} parent=23 // pred_region
          %172 = dma.done %s164, 128
        $region28: #{tpu_custom_call.1} parent=23 // pred_fallthru
          _
        %s173 = sand.u32 %s48, 1
        %s174 = scalar_lea.sflag [#allocation5], %s173
        %s175 = sand.u32 %s48, 1
        %s176 = smul.addr %s175, 8
        %s177 = scalar_lea.vmem [#allocation4], %s176
        %p178 = pneg %p61
        %p179 = pneg %p58
        %p180 = pneg %p87
        %p181 = pneg %p84
        %p182 = scmp.lt.s32.totalorder %s22, 0
        %s183 = scalar_select %p182, %s22, 0
        %s184 = smul.addr %s183, 4
        %s185 = scalar_lea.vmem %s1, %s184
        %p186 = pneg %p113
        %p187 = pneg %p110
        %p188 = scmp.lt.s32.totalorder %s22, 0
        %s189 = scalar_select %p188, %s22, 0
        %s190 = smul.addr %s189, 4
        %s191 = scalar_lea.vmem %s2, %s190
        %s192 = smul.u32 2, %s24
        %p193 = scmp.lt.s32.totalorder %s22, 0
        %s194 = scalar_select %p193, %s22, 0
        %s195 = smul.addr %s194, 4
        %s196 = scalar_lea.vmem %s1, %s195
        %p197 = scmp.lt.s32.totalorder %s22, 0
        %s198 = scalar_select %p197, %s22, 0
        %s199 = smul.addr %s198, 4
        %s200 = scalar_lea.vmem %s2, %s199
        %p201 = scmp.eq.s32.totalorder %s23, 0
        %p202 = scmp.eq.s32.totalorder %s24, 0
        %p203 = pnand %p201, %p202
        %p204 = pneg %p203
        // Predicated region
        $region29: #{tpu_custom_call.1} parent=23 // pred_check
          _
        $region30: #{tpu_custom_call.1} parent=23 // pred_check_branch
          %206 = sbr.rel (%p203) target = $region32
        $region31: #{tpu_custom_call.1} parent=23 // pred_region
          %207 = vst [vmem:[#allocation2] sm:$0xf] 0.0
          %208 = vst [vmem:[#allocation3] sm:$0xf] 0.0
        $region32: #{tpu_custom_call.1} parent=23 // pred_fallthru
          _
        %v209 = vld [vmem:[%s167] sm:$0xff]
        %v210 = vld [vmem:[#allocation2] sm:$0xf]
        %v211 = vld [vmem:[#allocation3] sm:$0xf]
        %v212 = vadd.f32 %v210, %v209
        %v213 = vmul.f32 %v209, %v209
        %v214 = vadd.f32 %v211, %v213
        %216 = vst [vmem:[#allocation1] ss:$2 sm:$0xff] %v209
        %v217 = vld.sshfl [vmem:[#allocation1 + $0x8] sm:$0xff pattern:$0x75316420]
        %v219 = vadd.f32 %v212, %v217
        %v220 = vrot.slane %v209, 4
        %v222 = vmul.f32 %v220, %v220
        %v223 = vadd.f32 %v214, %v222
        %224 = vst [vmem:[#allocation2] sm:$0xf] %v219
        %225 = vst [vmem:[#allocation3] sm:$0xf] %v223
        %p226 = scmp.eq.s32.totalorder %s23, 1
        %p227 = pnand %p226, %p202
        %p228 = pneg %p227
        // Predicated region
        $region33: #{tpu_custom_call.1} parent=23 // pred_check
          _
        $region34: #{tpu_custom_call.1} parent=23 // pred_check_branch
          %230 = sbr.rel (%p227) target = $region36
        $region35: #{tpu_custom_call.1} parent=23 // pred_region
          %v231 = vld [vmem:[#allocation2] sm:$0xf]
          %vm232 = vcmask 1043456
          %v233 = vsel %vm232, %v231, 0.0
          %234 = vadd.xlane.f32.xlu0 %v233
          %v235 = vpop.xlane.xlu0 %234
          %v236 = vld [vmem:[#allocation3] sm:$0xf]
          %v237 = vsel %vm232, %v236, 0.0
          %238 = vadd.xlane.f32.xlu0 %v237
          %v239 = vpop.xlane.xlu0 %238
          %v240 = vrcp.pop 512.0
          %v241 = vmul.f32 512.0, %v240
          %v242 = vsub.f32 1.0, %v241
          %v243 = vmul.f32 %v240, %v242
          %v244 = vadd.f32 %v240, %v243
          %vm245 = vweird.f32 %v240
          %v246 = vsel %vm245, %v240, %v244
          %v247 = vmul.f32 %v235, %v246
          %v248 = vmul.f32 %v235, %v247
          %v249 = vsub.f32 %v239, %v248
          %v250 = vrcp.pop 511.0
          %v251 = vmul.f32 511.0, %v250
          %v252 = vsub.f32 1.0, %v251
          %v253 = vmul.f32 %v250, %v252
          %v254 = vadd.f32 %v250, %v253
          %vm255 = vweird.f32 %v250
          %v256 = vsel %vm255, %v250, %v254
          %v257 = vmul.f32 %v249, %v256
          %v258 = vmax.f32 %v257, 0.0
          %vm259 = vcmask 3072
          %260 = vst.msk [vmem:[%s196] sm:$0xf] %vm259, %v247
          %261 = vst.msk [vmem:[%s200] sm:$0xf] %vm259, %v258
        $region36: #{tpu_custom_call.1} parent=23 // pred_fallthru
          _
        %p262 = scmp.lt.s32.totalorder %s22, 0
        %s263 = scalar_select %p262, %s22, 0
        %s264 = smul.addr %s263, 4
        %s265 = scalar_lea.vmem %s1, %s264
        %p266 = scmp.lt.s32.totalorder %s22, 0
        %s267 = scalar_select %p266, %s22, 0
        %s268 = smul.addr %s267, 4
        %s269 = scalar_lea.vmem %s2, %s268
        // Predicated region
        $region37: #{tpu_custom_call.1} parent=23 // pred_check
          %p270 = pneg %p84
        $region38: #{tpu_custom_call.1} parent=23 // pred_check_branch
          %272 = sbr.rel (%p270) target = $region40
        $region39: #{tpu_custom_call.1} parent=23 // pred_region
          _
        $region40: #{tpu_custom_call.1} parent=23 // pred_fallthru
          _
        // Predicated region
        $region41: #{tpu_custom_call.1} parent=23 // pred_check
          %p273 = pneg %p110
        $region42: #{tpu_custom_call.1} parent=23 // pred_check_branch
          %275 = sbr.rel (%p273) target = $region44
        $region43: #{tpu_custom_call.1} parent=23 // pred_region
          _
        $region44: #{tpu_custom_call.1} parent=23 // pred_fallthru
          _
        // Predicated region
        $region45: #{tpu_custom_call.1} parent=23 // pred_check
          %p276 = pneg %p84
        $region46: #{tpu_custom_call.1} parent=23 // pred_check_branch
          %278 = sbr.rel (%p276) target = $region48
        $region47: #{tpu_custom_call.1} parent=23 // pred_region
          %p279 = scmp.lt.s32.totalorder %s22, 0
          %s280 = scalar_select %p279, %s22, 0
          %s281 = smul.addr %s280, 4
          %s282 = scalar_lea.vmem %s1, %s281
        $region48: #{tpu_custom_call.1} parent=23 // pred_fallthru
          _
        // Predicated region
        $region49: #{tpu_custom_call.1} parent=23 // pred_check
          %p283 = pneg %p110
        $region50: #{tpu_custom_call.1} parent=23 // pred_check_branch
          %285 = sbr.rel (%p283) target = $region52
        $region51: #{tpu_custom_call.1} parent=23 // pred_region
          %p286 = scmp.lt.s32.totalorder %s22, 0
          %s287 = scalar_select %p286, %s22, 0
          %s288 = smul.addr %s287, 4
          %s289 = scalar_lea.vmem %s2, %s288
        $region52: #{tpu_custom_call.1} parent=23 // pred_fallthru
          _
      $region24: #{tpu_custom_call.1} parent=5 // pred_fallthru
        _
      %p290 = scmp.le.s32.totalorder 2, %s12
      // Predicated region
      $region53: #{tpu_custom_call.1} parent=5 // pred_check
        %p291 = pneg %p290
      $region54: #{tpu_custom_call.1} parent=5 // pred_check_branch
        %293 = sbr.rel (%p291) target = $region56
      $region55: #{tpu_custom_call.1} parent=5 // pred_region
        %s294 = ssub.s32 %s12, 2
      $region56: #{tpu_custom_call.1} parent=5 // pred_fallthru
        _
    $region6: #{tpu_custom_call.1} parent=1 // loop_footer
      %s16 = sadd.s32 1, %s12
    $region7: #{tpu_custom_call.1} parent=1 // loop_footer_branch
      %11 = sbr.rel target = $region3
    $region8: #{tpu_custom_call.1} parent=1 // loop_exit
      _
    %295 = vsyncpa [#allocation5], 1
    %s296 = scalar_lea.sflag [#allocation5], 1
    %297 = vsyncpa %s296, 1

</llo_original>
